<compile_context>
chip_gen: v6e
topology: v6e:2x2x1
jax: 0.10.0
libtpu: 0.0.40
codegen_flags: <defaults>
</compile_context>

<pallas_src>
import functools

import jax
import jax.numpy as jnp
from jax import lax
from jax.experimental import pallas as pl
from jax.experimental.pallas import tpu as pltpu

BN_EPS = 1e-5
LANE = 128
SUBLANE = 8
VMEM_LIMIT_BYTES = 48 * 1024 * 1024      # <= physical VMEM on v5e/v6e/v7x
VMEM_TILE_BUDGET = 40 * 1024 * 1024


def _round_up(x, m):
    return (x + m - 1) // m * m


# ----------------------------------------------------------------------------
# Kernels
# ----------------------------------------------------------------------------
def _linear_layer_kernel(*refs, nt, tm, n_real, rows_first, prev_affine,
                         add_bias, relu_out, compute_stats):
    """One MLP layer for one batch tile.

    Optionally applies the *previous* layer's deferred BN+ReLU as a fused
    affine (scale, offset) + max, then z = a @ W (+ b) (+ ReLU), and
    accumulates shifted batch statistics of z across the batch-tile grid axis.
    """
    it = iter(refs)
    scale_ref = offset_ref = b_ref = stats_ref = acc_ref = None
    if prev_affine:
        scale_ref = next(it)             # (1, din_pad)
        offset_ref = next(it)            # (1, din_pad)
    a_ref = next(it)                     # (TM, din_pad)
    w_ref = next(it)                     # (din_pad, dout_pad)
    if add_bias:
        b_ref = next(it)                 # (1, dout_pad)
    o_ref = next(it)                     # (TM, dout_pad)
    if compute_stats:
        stats_ref = next(it)             # (2, dout_pad)  [mean; var] output
        acc_ref = next(it)               # (3, dout_pad)  [shift; s1; s2] VMEM

    i = pl.program_id(0)

    a = a_ref[...]
    if prev_affine:                      # previous layer's BN + ReLU (deferred)
        a = jnp.maximum(a * scale_ref[...] + offset_ref[...], 0.0)

    z = jnp.dot(a, w_ref[...], preferred_element_type=jnp.float32)
    if add_bias:
        z = z + b_ref[...]
    if relu_out:
        z = jnp.maximum(z, 0.0)
    o_ref[...] = z

    if compute_stats:
        # exclude zero-padded batch rows from the statistics
        rows = lax.broadcasted_iota(jnp.int32, (tm, 1), 0) + i * tm
        rmask = (rows < n_real).astype(jnp.float32)

        @pl.when(i == 0)
        def _():
            # per-column shift = mean of the first tile (numerical stability)
            shift0 = jnp.sum(z * rmask, axis=0, keepdims=True) * (1.0 / rows_first)
            acc_ref[0:1, :] = shift0
            acc_ref[1:2, :] = jnp.zeros_like(shift0)
            acc_ref[2:3, :] = jnp.zeros_like(shift0)
            stats_ref[...] = jnp.zeros(stats_ref.shape, stats_ref.dtype)

        shift = acc_ref[0:1, :]
        d = (z - shift) * rmask
        acc_ref[1:2, :] += jnp.sum(d, axis=0, keepdims=True)
        acc_ref[2:3, :] += jnp.sum(d * d, axis=0, keepdims=True)

        @pl.when(i == nt - 1)
        def _():
            inv_n = 1.0 / n_real
            m1 = acc_ref[1:2, :] * inv_n
            mean = acc_ref[0:1, :] + m1
            var = jnp.maximum(acc_ref[2:3, :] * inv_n - m1 * m1, 0.0)
            stats_ref[0:1, :] = mean
            stats_ref[1:2, :] = var


def _affine_relu_kernel(scale_ref, offset_ref, z_ref, o_ref):
    """Finalize: BN (precomputed affine) + ReLU of the last activated layer."""
    o_ref[...] = jnp.maximum(z_ref[...] * scale_ref[...] + offset_ref[...], 0.0)


# ----------------------------------------------------------------------------
# Wrapper
# ----------------------------------------------------------------------------
def _mlp_forward_2d(x, params, *, batchnorm, last_activation, tile_m=512):
    """x: (N, D_in) f32; params: list of (w (Din,Dout), b, gamma, beta)."""
    N, d_in = x.shape
    L = len(params)
    dims = [d_in] + [w.shape[1] for (w, _, _, _) in params]
    dims_pad = [_round_up(d, LANE) for d in dims]
    d_out = dims[-1]
    max_w = max(dims_pad)

    # batch tile: as large as the VMEM budget allows (amortizes per-step cost)
    TM = min(_round_up(tile_m, SUBLANE), _round_up(N, SUBLANE))
    while TM > SUBLANE and 4 * (4 * TM * max_w + 2 * max_w * max_w) > VMEM_TILE_BUDGET:
        TM = _round_up(max(TM // 2, SUBLANE), SUBLANE)
    N_pad = _round_up(N, TM)
    T = N_pad // TM
    rows_first = min(TM, N)

    def has_act(l):
        return (l < L - 1) or last_activation

    # pad input once to a lane-dense slab
    a = jnp.zeros((N_pad, dims_pad[0]), jnp.float32).at[:N, :d_in].set(
        x.astype(jnp.float32))

    scale = offset = None                # deferred BN affine of previous layer
    for l, (w, b, g, bt) in enumerate(params):
        din, dout = w.shape
        dp_in, dp_out = dims_pad[l], dims_pad[l + 1]
        act = has_act(l)
        prev_affine = scale is not None
        compute_stats = bool(batchnorm) and act
        add_bias = not compute_stats     # bias cancelled by BN mean subtraction
        relu_out = act and not batchnorm

        w_pad = jnp.zeros((dp_in, dp_out), jnp.float32).at[:din, :dout].set(w)

        in_specs, args = [], []
        if prev_affine:
            in_specs += [pl.BlockSpec((1, dp_in), lambda i: (0, 0)),
                         pl.BlockSpec((1, dp_in), lambda i: (0, 0))]
            args += [scale, offset]
        in_specs.append(pl.BlockSpec((TM, dp_in), lambda i: (i, 0)))
        args.append(a)
        in_specs.append(pl.BlockSpec((dp_in, dp_out), lambda i: (0, 0)))
        args.append(w_pad)
        if add_bias:
            b_pad = jnp.zeros((1, dp_out), jnp.float32).at[0, :dout].set(b)
            in_specs.append(pl.BlockSpec((1, dp_out), lambda i: (0, 0)))
            args.append(b_pad)

        out_shape = [jax.ShapeDtypeStruct((N_pad, dp_out), jnp.float32)]
        out_specs = [pl.BlockSpec((TM, dp_out), lambda i: (i, 0))]
        scratch_shapes = []
        if compute_stats:
            out_shape.append(jax.ShapeDtypeStruct((2, dp_out), jnp.float32))
            out_specs.append(pl.BlockSpec((2, dp_out), lambda i: (0, 0)))
            scratch_shapes.append(pltpu.VMEM((3, dp_out), jnp.float32))

        kernel = functools.partial(
            _linear_layer_kernel, nt=T, tm=TM, n_real=N, rows_first=rows_first,
            prev_affine=prev_affine, add_bias=add_bias, relu_out=relu_out,
            compute_stats=compute_stats)

        cost = pl.CostEstimate(
            flops=2 * N_pad * dp_in * dp_out,
            transcendentals=0,
            bytes_accessed=4 * (N_pad * dp_in + dp_in * dp_out + N_pad * dp_out))

        outs = pl.pallas_call(
            kernel,
            grid=(T,),
            in_specs=in_specs,
            out_specs=tuple(out_specs) if compute_stats else out_specs[0],
            out_shape=tuple(out_shape) if compute_stats else out_shape[0],
            scratch_shapes=scratch_shapes,
            compiler_params=pltpu.CompilerParams(
                dimension_semantics=(("arbitrary",) if compute_stats
                                     else ("parallel",)),
                vmem_limit_bytes=VMEM_LIMIT_BYTES),
            cost_estimate=cost,
        )(*args)

        if compute_stats:
            z, stats = outs
            # fold gamma/beta/mean/var into one affine in plain JAX (O(dout))
            g_pad = jnp.zeros((dp_out,), jnp.float32).at[:dout].set(g)
            bt_pad = jnp.zeros((dp_out,), jnp.float32).at[:dout].set(bt)
            inv_std = lax.rsqrt(stats[1] + BN_EPS)
            sc = g_pad * inv_std
            scale = sc.reshape(1, dp_out)
            offset = (bt_pad - stats[0] * sc).reshape(1, dp_out)
        else:
            z = outs
            scale = offset = None
        a = z

    # final deferred BN + ReLU (only when the last layer has an activation)
    if scale is not None:
        dp_out = dims_pad[-1]
        cost = pl.CostEstimate(flops=3 * N_pad * dp_out, transcendentals=0,
                               bytes_accessed=4 * 2 * N_pad * dp_out)
        a = pl.pallas_call(
            _affine_relu_kernel,
            grid=(T,),
            in_specs=[pl.BlockSpec((1, dp_out), lambda i: (0, 0)),
                      pl.BlockSpec((1, dp_out), lambda i: (0, 0)),
                      pl.BlockSpec((TM, dp_out), lambda i: (i, 0))],
            out_specs=pl.BlockSpec((TM, dp_out), lambda i: (i, 0)),
            out_shape=jax.ShapeDtypeStruct((N_pad, dp_out), jnp.float32),
            compiler_params=pltpu.CompilerParams(
                dimension_semantics=("parallel",),
                vmem_limit_bytes=VMEM_LIMIT_BYTES),
            cost_estimate=cost,
        )(scale, offset, a)

    return a[:N, :d_out]


def mlp_forward(x, params, *, batchnorm=True, last_activation=True, tile_m=512):
    """Handles both the (N, feature) and (N, M, feature) input paths of the
    PyTorch module.  For 3-D input, Linear acts on the last dim and
    BatchNorm1d normalizes over (N, M) -- exactly the 2-D path on the reshaped
    (N*M, feature) tensor."""
    if x.ndim == 3:
        n, m, c = x.shape
        out = _mlp_forward_2d(x.reshape(n * m, c), params,
                              batchnorm=batchnorm,
                              last_activation=last_activation, tile_m=tile_m)
        return out.reshape(n, m, -1)
    return _mlp_forward_2d(x, params, batchnorm=batchnorm,
                           last_activation=last_activation, tile_m=tile_m)


class MLP:
    """JAX/Pallas port of the PyTorch MLP module (training-mode BatchNorm)."""

    def __init__(self, hidden_size, key, batchnorm=True, last_activation=True):
        self.hidden_size = tuple(hidden_size)
        self.batchnorm = batchnorm
        self.last_activation = last_activation
        self.params = []
        for i in range(len(hidden_size) - 1):
            in_dim, out_dim = hidden_size[i], hidden_size[i + 1]
            key, kw, kb = jax.random.split(key, 3)
            # PyTorch nn.Linear default init: U(-1/sqrt(in_dim), 1/sqrt(in_dim))
            bound = 1.0 / (in_dim ** 0.5)
            w = jax.random.uniform(kw, (in_dim, out_dim), jnp.float32, -bound, bound)
            b = jax.random.uniform(kb, (out_dim,), jnp.float32, -bound, bound)
            gamma = jnp.ones((out_dim,), jnp.float32)   # BatchNorm1d default weight
            beta = jnp.zeros((out_dim,), jnp.float32)   # BatchNorm1d default bias
            self.params.append((w, b, gamma, beta))

    def __call__(self, x):
        return mlp_forward(x, self.params,
                           batchnorm=self.batchnorm,
                           last_activation=self.last_activation)


def mlp_reference(x, params, *, batchnorm=True, last_activation=True):
    """Pure-JAX reference matching the PyTorch training-mode forward."""
    if x.ndim == 3:
        n, m, c = x.shape
        out = mlp_reference(x.reshape(n * m, c), params,
                            batchnorm=batchnorm, last_activation=last_activation)
        return out.reshape(n, m, -1)
    L = len(params)
    for l, (w, b, g, bt) in enumerate(params):
        has_act = (l < L - 1) or last_activation
        y = x @ w + b
        if batchnorm and has_act:
            mean = jnp.mean(y, axis=0, keepdims=True)
            var = jnp.mean((y - mean) ** 2, axis=0, keepdims=True)
            y = (y - mean) / jnp.sqrt(var + BN_EPS) * g + bt
        if has_act:
            y = jnp.maximum(y, 0.0)
        x = y
    return x


if __name__ == "__main__":
    key = jax.random.PRNGKey(0)
    k1, k2, k3, kp = jax.random.split(key, 4)

    hidden_size = (16, 32, 32, 8)
    mlp = MLP(hidden_size, kp, batchnorm=True, last_activation=True)
    ATOL = 2e-4

    # 2-D path, N not a multiple of 8 (exercises batch-row masking)
    N = 13
    x = jax.random.normal(k1, (N, hidden_size[0]), jnp.float32)
    out = jax.block_until_ready(mlp(x))
    ref = mlp_reference(x, mlp.params, batchnorm=True, last_activation=True)
    assert out.shape == (N, hidden_size[-1]), out.shape
    assert jnp.allclose(out, ref, atol=ATOL, rtol=ATOL), float(jnp.max(jnp.abs(out - ref)))

    # 3-D path: (N, M, feature_dim) -- the BatchNorm permute path of the module
    x3 = jax.random.normal(k2, (2, 4, hidden_size[0]), jnp.float32)
    out3 = jax.block_until_ready(mlp(x3))
    ref3 = mlp_reference(x3, mlp.params, batchnorm=True, last_activation=True)
    assert out3.shape == (2, 4, hidden_size[-1]), out3.shape
    assert jnp.allclose(out3, ref3, atol=ATOL, rtol=ATOL), float(jnp.max(jnp.abs(out3 - ref3)))

    # multi-tile batch axis (T > 1): exercises cross-tile shifted-stats accumulation
    xm = jax.random.normal(k3, (24, hidden_size[0]), jnp.float32)
    outm = jax.block_until_ready(
        mlp_forward(xm, mlp.params, batchnorm=True, last_activation=True, tile_m=8))
    refm = mlp_reference(xm, mlp.params, batchnorm=True, last_activation=True)
    assert jnp.allclose(outm, refm, atol=ATOL, rtol=ATOL), float(jnp.max(jnp.abs(outm - refm)))

    # no-BN / no-last-activation path (bias + optional ReLU fused in-producer)
    mlp2 = MLP(hidden_size, kp, batchnorm=False, last_activation=False)
    out2 = jax.block_until_ready(mlp2(x))
    ref2 = mlp_reference(x, mlp2.params, batchnorm=False, last_activation=False)
    assert jnp.allclose(out2, ref2, atol=ATOL, rtol=ATOL), float(jnp.max(jnp.abs(out2 - ref2)))

    print("KERNEL_OK")
</pallas_src>

<mosaic_0001>
module attributes {stable_mosaic.version = 11 : i64} {
  func.func @_linear_layer_kernel(%arg0: i32, %arg1: memref<16x128xf32, #tpu.memory_space<vmem>>, %arg2: memref<128x128xf32, #tpu.memory_space<vmem>>, %arg3: memref<16x128xf32, #tpu.memory_space<vmem>>, %arg4: memref<2x128xf32, #tpu.memory_space<vmem>>, %arg5: memref<3x128xf32, #tpu.memory_space<vmem>>) attributes {dimension_semantics = [#tpu.dimension_semantics<arbitrary>], iteration_bounds = array<i64: 1>, scalar_prefetch = 0 : i64, scratch_operands = 1 : i64, tpu.core_type = #tpu.core_type<tc>, window_params = [{transform_indices = @transform_0, window_bounds = array<i64: 16, 128>}, {pipeline_mode = #tpu.pipeline_mode<synchronous>, transform_indices = @transform_1, window_bounds = array<i64: 128, 128>}, {transform_indices = @transform_2, window_bounds = array<i64: 16, 128>}, {pipeline_mode = #tpu.pipeline_mode<synchronous>, transform_indices = @transform_3, window_bounds = array<i64: 2, 128>}]} {
    %c0 = arith.constant 0 : index
    %c0_0 = arith.constant 0 : index
    %0 = vector.load %arg1[%c0, %c0_0] : memref<16x128xf32, #tpu.memory_space<vmem>>, vector<16x128xf32>
    %c0_1 = arith.constant 0 : index
    %c0_2 = arith.constant 0 : index
    %1 = vector.load %arg2[%c0_1, %c0_2] : memref<128x128xf32, #tpu.memory_space<vmem>>, vector<128x128xf32>
    %cst = arith.constant dense<0.000000e+00> : vector<16x128xf32>
    %2 = tpu.matmul %0, %1, %cst {dimension_numbers = #tpu.dot_dimension_numbers<[1], [0], [0], [1], [0, 0, 1, 1], [], []>} : vector<16x128xf32>, vector<128x128xf32>, vector<16x128xf32> -> vector<16x128xf32>
    %c0_3 = arith.constant 0 : index
    %c0_4 = arith.constant 0 : index
    %3 = vector.load %arg3[%c0_3, %c0_4] : memref<16x128xf32, #tpu.memory_space<vmem>>, vector<16x128xf32>
    tpu.vector_store %arg3[%c0_3, %c0_4], %2 {strides = array<i32>} : memref<16x128xf32, #tpu.memory_space<vmem>>, vector<16x128xf32>,
    %4 = tpu.iota {dimensions = array<i32: 0>} : vector<16x1xi32>
    %c16_i32 = arith.constant 16 : i32
    %5 = arith.muli %arg0, %c16_i32 : i32
    %6 = vector.broadcast %5 : i32 to vector<16x1xi32>
    %7 = arith.addi %4, %6 : vector<16x1xi32>
    %c13_i32 = arith.constant 13 : i32
    %8 = vector.broadcast %c13_i32 : i32 to vector<16x1xi32>
    %9 = arith.cmpi slt, %7, %8 : vector<16x1xi32>
    %10 = arith.extui %9 : vector<16x1xi1> to vector<16x1xi32>
    %11 = arith.sitofp %10 : vector<16x1xi32> to vector<16x1xf32>
    %c0_i32 = arith.constant 0 : i32
    %12 = arith.cmpi eq, %arg0, %c0_i32 : i32
    %13 = arith.extui %12 : i1 to i32
    %c0_i32_5 = arith.constant 0 : i32
    %14 = arith.cmpi ne, %13, %c0_i32_5 : i32
    scf.if %14 {
      %34 = vector.broadcast %11 : vector<16x1xf32> to vector<16x128xf32>
      %35 = arith.mulf %2, %34 : vector<16x128xf32>
      %cst_18 = arith.constant dense<0.000000e+00> : vector<128xf32>
      %36 = vector.multi_reduction <add>, %35, %cst_18 [0] : vector<16x128xf32> to vector<128xf32>
      %37 = vector.shape_cast %36 : vector<128xf32> to vector<1x128xf32>
      %cst_19 = arith.constant 0.0769230798 : f32
      %38 = vector.broadcast %cst_19 : f32 to vector<1x128xf32>
      %39 = arith.mulf %37, %38 : vector<1x128xf32>
      %c0_20 = arith.constant 0 : index
      %c0_21 = arith.constant 0 : index
      %40 = vector.load %arg5[%c0_20, %c0_21] : memref<3x128xf32, #tpu.memory_space<vmem>>, vector<1x128xf32>
      tpu.vector_store %arg5[%c0_20, %c0_21], %39 {strides = array<i32>} : memref<3x128xf32, #tpu.memory_space<vmem>>, vector<1x128xf32>,
      %cst_22 = arith.constant 0.000000e+00 : f32
      %41 = vector.broadcast %cst_22 : f32 to vector<1x128xf32>
      %c1_23 = arith.constant 1 : index
      %c0_24 = arith.constant 0 : index
      %42 = vector.load %arg5[%c1_23, %c0_24] : memref<3x128xf32, #tpu.memory_space<vmem>>, vector<1x128xf32>
      tpu.vector_store %arg5[%c1_23, %c0_24], %41 {strides = array<i32>} : memref<3x128xf32, #tpu.memory_space<vmem>>, vector<1x128xf32>,
      %cst_25 = arith.constant 0.000000e+00 : f32
      %43 = vector.broadcast %cst_25 : f32 to vector<1x128xf32>
      %c2_26 = arith.constant 2 : index
      %c0_27 = arith.constant 0 : index
      %44 = vector.load %arg5[%c2_26, %c0_27] : memref<3x128xf32, #tpu.memory_space<vmem>>, vector<1x128xf32>
      tpu.vector_store %arg5[%c2_26, %c0_27], %43 {strides = array<i32>} : memref<3x128xf32, #tpu.memory_space<vmem>>, vector<1x128xf32>,
      %cst_28 = arith.constant 0.000000e+00 : f32
      %45 = vector.broadcast %cst_28 : f32 to vector<2x128xf32>
      %c0_29 = arith.constant 0 : index
      %c0_30 = arith.constant 0 : index
      %46 = vector.load %arg4[%c0_29, %c0_30] : memref<2x128xf32, #tpu.memory_space<vmem>>, vector<2x128xf32>
      tpu.vector_store %arg4[%c0_29, %c0_30], %45 {strides = array<i32>} : memref<2x128xf32, #tpu.memory_space<vmem>>, vector<2x128xf32>,
    } else {
    }
    %c0_6 = arith.constant 0 : index
    %c0_7 = arith.constant 0 : index
    %15 = vector.load %arg5[%c0_6, %c0_7] : memref<3x128xf32, #tpu.memory_space<vmem>>, vector<1x128xf32>
    %16 = vector.broadcast %15 : vector<1x128xf32> to vector<16x128xf32>
    %17 = arith.subf %2, %16 : vector<16x128xf32>
    %18 = vector.broadcast %11 : vector<16x1xf32> to vector<16x128xf32>
    %19 = arith.mulf %17, %18 : vector<16x128xf32>
    %c1 = arith.constant 1 : index
    %c0_8 = arith.constant 0 : index
    %20 = vector.load %arg5[%c1, %c0_8] : memref<3x128xf32, #tpu.memory_space<vmem>>, vector<1x128xf32>
    %cst_9 = arith.constant dense<0.000000e+00> : vector<128xf32>
    %21 = vector.multi_reduction <add>, %19, %cst_9 [0] : vector<16x128xf32> to vector<128xf32>
    %22 = vector.shape_cast %21 : vector<128xf32> to vector<1x128xf32>
    %23 = arith.addf %20, %22 : vector<1x128xf32>
    %c1_10 = arith.constant 1 : index
    %c0_11 = arith.constant 0 : index
    %24 = vector.load %arg5[%c1_10, %c0_11] : memref<3x128xf32, #tpu.memory_space<vmem>>, vector<1x128xf32>
    tpu.vector_store %arg5[%c1_10, %c0_11], %23 {strides = array<i32>} : memref<3x128xf32, #tpu.memory_space<vmem>>, vector<1x128xf32>,
    %c2 = arith.constant 2 : index
    %c0_12 = arith.constant 0 : index
    %25 = vector.load %arg5[%c2, %c0_12] : memref<3x128xf32, #tpu.memory_space<vmem>>, vector<1x128xf32>
    %26 = arith.mulf %19, %19 : vector<16x128xf32>
    %cst_13 = arith.constant dense<0.000000e+00> : vector<128xf32>
    %27 = vector.multi_reduction <add>, %26, %cst_13 [0] : vector<16x128xf32> to vector<128xf32>
    %28 = vector.shape_cast %27 : vector<128xf32> to vector<1x128xf32>
    %29 = arith.addf %25, %28 : vector<1x128xf32>
    %c2_14 = arith.constant 2 : index
    %c0_15 = arith.constant 0 : index
    %30 = vector.load %arg5[%c2_14, %c0_15] : memref<3x128xf32, #tpu.memory_space<vmem>>, vector<1x128xf32>
    tpu.vector_store %arg5[%c2_14, %c0_15], %29 {strides = array<i32>} : memref<3x128xf32, #tpu.memory_space<vmem>>, vector<1x128xf32>,
    %c0_i32_16 = arith.constant 0 : i32
    %31 = arith.cmpi eq, %arg0, %c0_i32_16 : i32
    %32 = arith.extui %31 : i1 to i32
    %c0_i32_17 = arith.constant 0 : i32
    %33 = arith.cmpi ne, %32, %c0_i32_17 : i32
    scf.if %33 {
      %c1_18 = arith.constant 1 : index
      %c0_19 = arith.constant 0 : index
      %34 = vector.load %arg5[%c1_18, %c0_19] : memref<3x128xf32, #tpu.memory_space<vmem>>, vector<1x128xf32>
      %cst_20 = arith.constant 0.0769230798 : f32
      %35 = vector.broadcast %cst_20 : f32 to vector<1x128xf32>
      %36 = arith.mulf %34, %35 : vector<1x128xf32>
      %c0_21 = arith.constant 0 : index
      %c0_22 = arith.constant 0 : index
      %37 = vector.load %arg5[%c0_21, %c0_22] : memref<3x128xf32, #tpu.memory_space<vmem>>, vector<1x128xf32>
      %38 = arith.addf %37, %36 : vector<1x128xf32>
      %c2_23 = arith.constant 2 : index
      %c0_24 = arith.constant 0 : index
      %39 = vector.load %arg5[%c2_23, %c0_24] : memref<3x128xf32, #tpu.memory_space<vmem>>, vector<1x128xf32>
      %cst_25 = arith.constant 0.0769230798 : f32
      %40 = vector.broadcast %cst_25 : f32 to vector<1x128xf32>
      %41 = arith.mulf %39, %40 : vector<1x128xf32>
      %42 = arith.mulf %36, %36 : vector<1x128xf32>
      %43 = arith.subf %41, %42 : vector<1x128xf32>
      %cst_26 = arith.constant 0.000000e+00 : f32
      %44 = vector.broadcast %cst_26 : f32 to vector<1x128xf32>
      %45 = arith.maximumf %43, %44 : vector<1x128xf32>
      %c0_27 = arith.constant 0 : index
      %c0_28 = arith.constant 0 : index
      %46 = vector.load %arg4[%c0_27, %c0_28] : memref<2x128xf32, #tpu.memory_space<vmem>>, vector<1x128xf32>
      tpu.vector_store %arg4[%c0_27, %c0_28], %38 {strides = array<i32>} : memref<2x128xf32, #tpu.memory_space<vmem>>, vector<1x128xf32>,
      %c1_29 = arith.constant 1 : index
      %c0_30 = arith.constant 0 : index
      %47 = vector.load %arg4[%c1_29, %c0_30] : memref<2x128xf32, #tpu.memory_space<vmem>>, vector<1x128xf32>
      tpu.vector_store %arg4[%c1_29, %c0_30], %45 {strides = array<i32>} : memref<2x128xf32, #tpu.memory_space<vmem>>, vector<1x128xf32>,
    } else {
    }
    return
  }
  func.func @transform_0(%arg0: i32) -> (i32, i32) {
    %c0_i32 = arith.constant 0 : i32
    %c0_i32_0 = arith.constant 0 : i32
    return %arg0, %c0_i32 : i32, i32
  }
  func.func @transform_1(%arg0: i32) -> (i32, i32) {
    %c0_i32 = arith.constant 0 : i32
    %c0_i32_0 = arith.constant 0 : i32
    %c0_i32_1 = arith.constant 0 : i32
    return %c0_i32, %c0_i32_0 : i32, i32
  }
  func.func @transform_2(%arg0: i32) -> (i32, i32) {
    %c0_i32 = arith.constant 0 : i32
    %c0_i32_0 = arith.constant 0 : i32
    return %arg0, %c0_i32 : i32, i32
  }
  func.func @transform_3(%arg0: i32) -> (i32, i32) {
    %c0_i32 = arith.constant 0 : i32
    %c0_i32_0 = arith.constant 0 : i32
    %c0_i32_1 = arith.constant 0 : i32
    return %c0_i32, %c0_i32_0 : i32, i32
  }
}

</mosaic_0001>

<llo_original>
// kernel: tpu_custom_call.1
$region0: #{tpu_custom_call.1}
  #allocation0 [shape = 'u32[]', space=smem, size = 0x4, offset = 0x4, fixed_abs, tag = 'smem constant byte address 0x4 - core index']
  #allocation1 [shape = 'u32[144,128]{1,0:T(1,128)}', space=vmem, size = 0x12000, scoped, tag = 'internal scratch']
  #allocation2 [shape = 'f32[3,128]{1,0:T(4,128)}', space=vmem, size = 0x800, scoped, tag = 'scratch operand']
  %s0 = inlined_call_operand.hbm [shape: f32[16,128], index: 0, kind: input, shape index: {}]
  %s1 = inlined_call_operand.hbm [shape: f32[128,128], index: 1, kind: input, shape index: {}]
  %s2 = inlined_call_operand.hbm [shape: f32[16,128], index: 2, kind: output, shape index: {0}]
  %s3 = inlined_call_operand.hbm [shape: f32[2,128], index: 3, kind: output, shape index: {1}]
  %4 = xla_tuple %s2, %s3
  %s5 = sld [smem:[#allocation0]]
  $region42: #{tpu_custom_call.1} parent=0
    _
  %s7 = ssub.s32 1, %s5
  %s8 = scalar_select 0, %s7, %s5
  $region1: #{tpu_custom_call.1} parent=0
    #allocation3 [shape = 'u8[8192]{0}', space=vmem, size = 0x2000, scoped, tag = 'input window, operand 0, single buffered']
    #allocation4 [shape = 's32[1]{0}', space=sflag, size = 0x4, scoped, tag = 'scoped memory for tpu_custom_call.1']
    #allocation5 [shape = 's32[1]{0}', space=sflag, size = 0x4, scoped, tag = 'scoped memory for tpu_custom_call.1']
    #allocation6 [shape = 'u8[65536]{0}', space=vmem, size = 0x10000, scoped, tag = 'input window, operand 1, single buffered']
    #allocation7 [shape = 's32[1]{0}', space=sflag, size = 0x4, scoped, tag = 'scoped memory for tpu_custom_call.1']
    #allocation8 [shape = 'u8[8192]{0}', space=vmem, size = 0x2000, scoped, tag = 'output window, operand 0, single buffered']
    #allocation9 [shape = 'u8[1024]{0}', space=vmem, size = 0x400, scoped, tag = 'output window, operand 1, single buffered']
    #allocation10 [shape = 's32[1]{0}', space=sflag, size = 0x4, scoped, tag = 'scoped memory for tpu_custom_call.1']
    %9 = vsyncpa [#allocation4], 0
    %10 = vsyncpa [#allocation7], 0
    %11 = vsyncpa [#allocation5], 0
    %12 = vsyncpa [#allocation10], 0
    // Predicated region
    $region2: #{tpu_custom_call.1} parent=1 // pred_check
      _
    $region3: #{tpu_custom_call.1} parent=1 // pred_check_branch
      %14 = sbr.rel (0) target = $region5
    $region4: #{tpu_custom_call.1} parent=1 // pred_region
      %s16 = ssub.s32 256, 256
      %17 = vsyncadd [#allocation4], %s16
      %s18 = sshll.u32 [#allocation3], 4
      %s19 = int_to_ptr.vmem [resolvable:$true] %s18
      %24 = dma.hbm_to_vmem [thread:$0]  %s0, 256, %s19, [#allocation4], 128, 128, 8
    $region5: #{tpu_custom_call.1} parent=1 // pred_fallthru
      _
    // Predicated region
    $region6: #{tpu_custom_call.1} parent=1 // pred_check
      _
    $region7: #{tpu_custom_call.1} parent=1 // pred_check_branch
      %26 = sbr.rel (0) target = $region9
    $region8: #{tpu_custom_call.1} parent=1 // pred_region
      %s28 = ssub.s32 2048, 2048
      %29 = vsyncadd [#allocation7], %s28
      %s30 = sshll.u32 [#allocation6], 4
      %s31 = int_to_ptr.vmem [resolvable:$true] %s30
      %36 = dma.hbm_to_vmem [thread:$0]  %s1, 2048, %s31, [#allocation7], 128, 128, 8
    $region9: #{tpu_custom_call.1} parent=1 // pred_fallthru
      _
    // Predicated region
    $region10: #{tpu_custom_call.1} parent=1 // pred_check
      _
    $region11: #{tpu_custom_call.1} parent=1 // pred_check_branch
      %38 = sbr.rel (0) target = $region13
    $region12: #{tpu_custom_call.1} parent=1 // pred_region
      %39 = dma.done [#allocation4], 256
    $region13: #{tpu_custom_call.1} parent=1 // pred_fallthru
      _
    // Predicated region
    $region14: #{tpu_custom_call.1} parent=1 // pred_check
      _
    $region15: #{tpu_custom_call.1} parent=1 // pred_check_branch
      %41 = sbr.rel (0) target = $region17
    $region16: #{tpu_custom_call.1} parent=1 // pred_region
      %42 = dma.done [#allocation7], 2048
    $region17: #{tpu_custom_call.1} parent=1 // pred_fallthru
      _
    %v43 = vld [vmem:[#allocation3] sm:$0xff]
    %v44 = vld [vmem:[#allocation3 + $0x8] sm:$0xff]
    %v45 = vld [vmem:[#allocation6] sm:$0xff]
    %v46 = vld [vmem:[#allocation6 + $0x8] sm:$0xff]
    %v47 = vld [vmem:[#allocation6 + $0x10] sm:$0xff]
    %v48 = vld [vmem:[#allocation6 + $0x18] sm:$0xff]
    %v49 = vld [vmem:[#allocation6 + $0x20] sm:$0xff]
    %v50 = vld [vmem:[#allocation6 + $0x28] sm:$0xff]
    %v51 = vld [vmem:[#allocation6 + $0x30] sm:$0xff]
    %v52 = vld [vmem:[#allocation6 + $0x38] sm:$0xff]
    %v53 = vld [vmem:[#allocation6 + $0x40] sm:$0xff]
    %v54 = vld [vmem:[#allocation6 + $0x48] sm:$0xff]
    %v55 = vld [vmem:[#allocation6 + $0x50] sm:$0xff]
    %v56 = vld [vmem:[#allocation6 + $0x58] sm:$0xff]
    %v57 = vld [vmem:[#allocation6 + $0x60] sm:$0xff]
    %v58 = vld [vmem:[#allocation6 + $0x68] sm:$0xff]
    %v59 = vld [vmem:[#allocation6 + $0x70] sm:$0xff]
    %v60 = vld [vmem:[#allocation6 + $0x78] sm:$0xff]
    %61 = vmatprep.subr.mxu0 0.0
    %62 = vmatpush1.msra.mxu0 %v60
    %63 = vmatprep.subr.mxu0 0.0
    %64 = vmatpush1.msra.mxu0 %v59
    %65 = vmatprep.subr.mxu0 0.0
    %66 = vmatpush1.msra.mxu0 %v58
    %67 = vmatprep.subr.mxu0 0.0
    %68 = vmatpush1.msra.mxu0 %v57
    %69 = vmatprep.subr.mxu0 0.0
    %70 = vmatpush1.msra.mxu0 %v56
    %71 = vmatprep.subr.mxu0 0.0
    %72 = vmatpush1.msra.mxu0 %v55
    %73 = vmatprep.subr.mxu0 0.0
    %74 = vmatpush1.msra.mxu0 %v54
    %75 = vmatprep.subr.mxu0 0.0
    %76 = vmatpush1.msra.mxu0 %v53
    %77 = vmatprep.subr.mxu0 0.0
    %78 = vmatpush1.msra.mxu0 %v52
    %79 = vmatprep.subr.mxu0 0.0
    %80 = vmatpush1.msra.mxu0 %v51
    %81 = vmatprep.subr.mxu0 0.0
    %82 = vmatpush1.msra.mxu0 %v50
    %83 = vmatprep.subr.mxu0 0.0
    %84 = vmatpush1.msra.mxu0 %v49
    %85 = vmatprep.subr.mxu0 0.0
    %86 = vmatpush1.msra.mxu0 %v48
    %87 = vmatprep.subr.mxu0 0.0
    %88 = vmatpush1.msra.mxu0 %v47
    %89 = vmatprep.subr.mxu0 0.0
    %90 = vmatpush1.msra.mxu0 %v46
    %91 = vmatprep.subr.mxu0 0.0
    %92 = vmatpush1.msra.mxu0 %v45
    %93 = vmatprep.subr.mxu0 0.0
    %94 = vmatpush2.msra.mxu0 0.0
    %95 = vmatprep.subr.mxu0 0.0
    %96 = vmatpush2.msra.mxu0 0.0
    %97 = vmatprep.subr.mxu0 0.0
    %98 = vmatpush2.msra.mxu0 0.0
    %99 = vmatprep.subr.mxu0 0.0
    %100 = vmatpush2.msra.mxu0 0.0
    %101 = vmatprep.subr.mxu0 0.0
    %102 = vmatpush2.msra.mxu0 0.0
    %103 = vmatprep.subr.mxu0 0.0
    %104 = vmatpush2.msra.mxu0 0.0
    %105 = vmatprep.subr.mxu0 0.0
    %106 = vmatpush2.msra.mxu0 0.0
    %107 = vmatprep.subr.mxu0 0.0
    %108 = vmatpush2.msra.mxu0 0.0
    %109 = vmatprep.subr.mxu0 0.0
    %110 = vmatpush2.msra.mxu0 0.0
    %111 = vmatprep.subr.mxu0 0.0
    %112 = vmatpush2.msra.mxu0 0.0
    %113 = vmatprep.subr.mxu0 0.0
    %114 = vmatpush2.msra.mxu0 0.0
    %115 = vmatprep.subr.mxu0 0.0
    %116 = vmatpush2.msra.mxu0 0.0
    %117 = vmatprep.subr.mxu0 0.0
    %118 = vmatpush2.msra.mxu0 0.0
    %119 = vmatprep.subr.mxu0 0.0
    %120 = vmatpush2.msra.mxu0 0.0
    %121 = vmatprep.subr.mxu0 0.0
    %122 = vmatpush2.msra.mxu0 0.0
    %123 = vmatprep.subr.mxu0 0.0
    %124 = vmatpush2.msra.mxu0 0.0
    %125 = vmatprep.mubr.f32.mxu0 0.0
    %126 = vmatmul.mubr.f32.gmra.mxu0 %v43
    %v127 = vpop.f32.mrf.mxu0
    %v128 = vadd.f32 0.0, %v127
    %v129 = vpop.f32.mrf.mxu0
    %130 = vmatprep.mubr.f32.mxu0 0.0
    %131 = vmatmul.mubr.f32.gmra.mxu0 %v44
    %v132 = vpop.f32.mrf.mxu0
    %v133 = vadd.f32 0.0, %v132
    %v134 = vpop.f32.mrf.mxu0
    %135 = vdwg.mxu0
    %136 = vst [vmem:[#allocation8] sm:$0xff] %v128
    %137 = vst [vmem:[#allocation8 + $0x8] sm:$0xff] %v133
    %v138 = vlaneseq
    %v139 = vshrl.u32 %v138, 7
    %v140 = vadd.s32 %v139, 8
    %s141 = smul.u32 0, 16
    %v142 = vstv %s141
    %v143 = vadd.s32 %v139, %v142
    %v144 = vadd.s32 %v140, %v142
    %vm145 = vcmp.lt.s32.totalorder %v143, 13
    %vm146 = vcmp.lt.s32.totalorder %v144, 13
    %v147 = vsel %vm145, 1, 0
    %v148 = vsel %vm146, 1, 0
    %v149 = vcvt.s32.f32 %v147
    %v150 = vcvt.s32.f32 %v148
    %p151 = scmp.eq.s32.totalorder 0, 0
    // Predicated region
    $region18: #{tpu_custom_call.1} parent=1 // pred_check
      %p152 = pneg %p151
    $region19: #{tpu_custom_call.1} parent=1 // pred_check_branch
      %154 = sbr.rel (%p152) target = $region21
    $region20: #{tpu_custom_call.1} parent=1 // pred_region
      %v155 = vmul.f32 %v128, %v149
      %v156 = vmul.f32 %v133, %v150
      %v157 = vadd.f32 %v155, %v156
      %v158 = vrot.slane %v157, 4
      %v159 = vadd.f32 %v157, %v158
      %v160 = vrot.slane %v159, 2
      %v161 = vadd.f32 %v159, %v160
      %v162 = vrot.slane %v161, 1
      %v163 = vadd.f32 %v161, %v162
      %v164 = vmul.f32 %v163, 0.07692308
      %165 = vst [vmem:[#allocation2] sm:$0x1] %v164
      %166 = vst [vmem:[#allocation2 + $0x1] sm:$0x1] 0.0
      %167 = vst [vmem:[#allocation2 + $0x2] sm:$0x1] 0.0
      %168 = vst [vmem:[#allocation9] sm:$0x3] 0.0
    $region21: #{tpu_custom_call.1} parent=1 // pred_fallthru
      _
    %v169 = vld [vmem:[#allocation2] sm:$0x1]
    %v170 = vlaneseq
    %v171 = vshrl.u32 %v170, 7
    %v172 = vsub.s32 0, %v171
    %v173 = vrot.slane %v169, %v172
    %v174 = vsub.f32 %v128, %v173
    %v175 = vsub.f32 %v133, %v173
    %v176 = vmul.f32 %v174, %v149
    %v177 = vmul.f32 %v175, %v150
    %v178 = vld [vmem:[#allocation2 + $0x1] sm:$0x1]
    %v179 = vadd.f32 %v176, %v177
    %v180 = vrot.slane %v179, 4
    %v181 = vadd.f32 %v179, %v180
    %v182 = vrot.slane %v181, 2
    %v183 = vadd.f32 %v181, %v182
    %v184 = vrot.slane %v183, 1
    %v185 = vadd.f32 %v183, %v184
    %v186 = vadd.f32 %v178, %v185
    %187 = vst [vmem:[#allocation2 + $0x1] sm:$0x1] %v186
    %v188 = vld [vmem:[#allocation2 + $0x2] sm:$0x1]
    %v189 = vmul.f32 %v176, %v176
    %v190 = vmul.f32 %v177, %v177
    %v191 = vadd.f32 %v189, %v190
    %v192 = vrot.slane %v191, 4
    %v193 = vadd.f32 %v191, %v192
    %v194 = vrot.slane %v193, 2
    %v195 = vadd.f32 %v193, %v194
    %v196 = vrot.slane %v195, 1
    %v197 = vadd.f32 %v195, %v196
    %v198 = vadd.f32 %v188, %v197
    %199 = vst [vmem:[#allocation2 + $0x2] sm:$0x1] %v198
    // Predicated region
    $region22: #{tpu_custom_call.1} parent=1 // pred_check
      %p200 = pneg %p151
    $region23: #{tpu_custom_call.1} parent=1 // pred_check_branch
      %202 = sbr.rel (%p200) target = $region25
    $region24: #{tpu_custom_call.1} parent=1 // pred_region
      %v203 = vld [vmem:[#allocation2 + $0x1] sm:$0x1]
      %v204 = vmul.f32 %v203, 0.07692308
      %v205 = vld [vmem:[#allocation2] sm:$0x1]
      %v206 = vadd.f32 %v205, %v204
      %v207 = vld [vmem:[#allocation2 + $0x2] sm:$0x1]
      %v208 = vmul.f32 %v207, 0.07692308
      %v209 = vmul.f32 %v204, %v204
      %v210 = vsub.f32 %v208, %v209
      %v211 = vmax.f32 %v210, 0.0
      %212 = vst [vmem:[#allocation9] sm:$0x1] %v206
      %213 = vst [vmem:[#allocation9 + $0x1] sm:$0x1] %v211
    $region25: #{tpu_custom_call.1} parent=1 // pred_fallthru
      _
    // Predicated region
    $region26: #{tpu_custom_call.1} parent=1 // pred_check
      _
    $region27: #{tpu_custom_call.1} parent=1 // pred_check_branch
      %215 = sbr.rel (0) target = $region29
    $region28: #{tpu_custom_call.1} parent=1 // pred_region
      %s217 = ssub.s32 256, 256
      %218 = vsyncadd [#allocation5], %s217
      %s219 = sshll.u32 [#allocation8], 4
      %s220 = int_to_ptr.vmem [resolvable:$true] %s219
      %225 = dma.vmem_to_hbm [thread:$0]  %s220, 256, %s2, [#allocation5], 128, 128, 8
    $region29: #{tpu_custom_call.1} parent=1 // pred_fallthru
      _
    // Predicated region
    $region30: #{tpu_custom_call.1} parent=1 // pred_check
      _
    $region31: #{tpu_custom_call.1} parent=1 // pred_check_branch
      %227 = sbr.rel (0) target = $region33
    $region32: #{tpu_custom_call.1} parent=1 // pred_region
      %s229 = ssub.s32 32, 32
      %230 = vsyncadd [#allocation10], %s229
      %s232 = sshll.u32 [#allocation9], 4
      %s233 = int_to_ptr.vmem [resolvable:$true] %s232
      %235 = dma.vmem_to_hbm [thread:$0]  %s233, 32, %s3, [#allocation10]
    $region33: #{tpu_custom_call.1} parent=1 // pred_fallthru
      _
    // Predicated region
    $region34: #{tpu_custom_call.1} parent=1 // pred_check
      _
    $region35: #{tpu_custom_call.1} parent=1 // pred_check_branch
      %237 = sbr.rel (0) target = $region37
    $region36: #{tpu_custom_call.1} parent=1 // pred_region
      %238 = dma.done [#allocation5], 256
    $region37: #{tpu_custom_call.1} parent=1 // pred_fallthru
      _
    // Predicated region
    $region38: #{tpu_custom_call.1} parent=1 // pred_check
      _
    $region39: #{tpu_custom_call.1} parent=1 // pred_check_branch
      %240 = sbr.rel (0) target = $region41
    $region40: #{tpu_custom_call.1} parent=1 // pred_region
      %241 = dma.done [#allocation10], 32
    $region41: #{tpu_custom_call.1} parent=1 // pred_fallthru
      _
    %242 = vsyncpa [#allocation4], 1
    %243 = vsyncpa [#allocation7], 1
    %244 = vsyncpa [#allocation5], 1
    %245 = vsyncpa [#allocation10], 1

</llo_original>
